<compile_context>
chip_gen: v6e
topology: v6e:2x2x1
jax: 0.10.0
libtpu: 0.0.40
codegen_flags: <defaults>
</compile_context>

<pallas_src>
import jax
import jax.numpy as jnp
from jax.experimental import pallas as pl
from jax.experimental.pallas import tpu as pltpu

_LANE = 128
_SUBLANE = 8


def _round_up(x, m):
    return ((x + m - 1) // m) * m


def _cdiv(a, b):
    return -(-a // b)


def _sublane_for(dtype):
    # Sub-32-bit dtypes pack along sublanes: bf16 vreg is [16,128], int8/fp8 [32,128].
    return max(_SUBLANE, 32 // jnp.dtype(dtype).itemsize)


def _vmem_capacity_bytes():
    try:
        return int(pltpu.get_tpu_info().vmem_capacity_bytes)
    except Exception:
        return 64 << 20  # conservative fallback: v7x per-TensorCore VMEM


def _linear_kernel(x_ref, w_ref, b_ref, o_ref, acc_ref):
    # x: (tb, tk), w: (tk, Np), b: (1, Np), o: (tb, N), acc: (tb, Np) f32 scratch.
    k = pl.program_id(1)

    @pl.when(k == 0)
    def _init():
        acc_ref[...] = jnp.zeros_like(acc_ref)

    acc_ref[...] += jnp.dot(x_ref[...], w_ref[...],
                            preferred_element_type=jnp.float32)

    @pl.when(k == pl.num_programs(1) - 1)
    def _store():
        n = o_ref.shape[-1]
        # Epilogue math stays in f32 (v5e VPU has no bf16 path); single cast on store.
        logits = acc_ref[...][:, :n] + b_ref[...][:, :n].astype(jnp.float32)
        o_ref[...] = logits.astype(o_ref.dtype)
        # TODO(synk): if a consumer wants probabilities, fuse sigmoid/softmax here
        # (EUP exp/reciprocal are essentially free in this HBM-bound kernel).


def prepare_params(weight, bias):
    """One-time layout prep (call at init, NOT per forward):
    weight (N, K) -> (K, Np) zero-padded; bias (N,) -> (1, Np) zero-padded,
    Np = round_up(N, 128) so the resident weight / MXU feed is lane-dense."""
    n, k = weight.shape
    np_ = _round_up(n, _LANE)
    w_t = jnp.zeros((k, np_), dtype=weight.dtype).at[:, :n].set(weight.T)
    b2d = jnp.zeros((1, np_), dtype=bias.dtype).at[0, :n].set(bias)
    return w_t, b2d, n


def logistic_regression_forward(x, w_t_padded, bias_padded, num_classes):
    """y = x @ weight.T + bias with (w_t_padded, bias_padded) from prepare_params.
    Returns (B, num_classes), matching torch.nn.Linear semantics."""
    B, K = x.shape
    Kw, Np = w_t_padded.shape
    N = int(num_classes)
    assert Kw == K and Np % _LANE == 0 and Np >= N

    out_dtype = x.dtype
    x_it = jnp.dtype(x.dtype).itemsize
    w_it = jnp.dtype(w_t_padded.dtype).itemsize
    b_it = jnp.dtype(bias_padded.dtype).itemsize
    o_it = jnp.dtype(out_dtype).itemsize
    sub = _sublane_for(x.dtype)

    vmem_cap = _vmem_capacity_bytes()
    usable = max(16 << 20, vmem_cap - (8 << 20))  # leave headroom for compiler scratch

    # ---- K tiling: only when the resident weight would hog VMEM, and only for
    #      lane-aligned even splits (padded K columns must stay exact zeros).
    tk = K
    if K * Np * w_it > usable // 2 and K % _LANE == 0:
        for cand in range(2, max(2, K // _LANE) + 1):
            if K % cand == 0 and (K // cand) % _LANE == 0:
                if 2 * (K // cand) * Np * w_it <= usable // 2:
                    tk = K // cand
                    break
        # TODO(synk): K that cannot be split into even 128-multiples falls back to a
        # single resident weight block; zero-pad K at init time if that overflows VMEM.
    nk = K // tk
    w_bufs = 1 if nk == 1 else 2  # constant-index weight block is single-buffered

    # ---- Batch tile from the remaining VMEM budget (dtype-aware sublane rounding).
    B_pad = _round_up(B, sub)
    resident = w_bufs * tk * Np * w_it + Np * b_it
    stream_budget = max(2 << 20, usable - resident)
    per_row = 2 * tk * x_it + 2 * N * o_it + Np * 4  # x dbuf + out dbuf + f32 acc
    tb = (stream_budget // per_row) // sub * sub
    tb = max(sub, min(tb, 2048, B_pad))
    # Ensure the "parallel" batch axis has >= 2 steps for moderate B: v7x has 2
    # TensorCores sharded over parallel grid axes (free on v5e/v6e).
    if B > sub and tb >= B_pad:
        tb = max(sub, _round_up(_cdiv(B, 2), sub))
    nb = _cdiv(B, tb)

    # ---- Honest VMEM accounting for the limit (generation-aware cap).
    vmem_need = (2 * tb * tk * x_it            # double-buffered x tiles
                 + w_bufs * tk * Np * w_it     # weight (1 buf if resident)
                 + Np * b_it                   # bias (single-buffered)
                 + 2 * tb * N * o_it           # double-buffered out tiles
                 + tb * Np * 4)                # f32 accumulator scratch
    vmem_limit = int(min(max(vmem_need * 3 // 2, 4 << 20), usable))

    cost = pl.CostEstimate(
        flops=2 * B * K * Np,
        transcendentals=0,
        bytes_accessed=B * K * x_it + K * Np * w_it + Np * b_it + B * N * o_it,
    )

    if nk == 1:
        w_spec = pl.BlockSpec((tk, Np), lambda i, k: (k, 0),
                              pipeline_mode=pl.Buffered(1))
    else:
        w_spec = pl.BlockSpec((tk, Np), lambda i, k: (k, 0))
    b_spec = pl.BlockSpec((1, Np), lambda i, k: (0, 0),
                          pipeline_mode=pl.Buffered(1))

    return pl.pallas_call(
        _linear_kernel,
        out_shape=jax.ShapeDtypeStruct((B, N), out_dtype),
        grid_spec=pltpu.PrefetchScalarGridSpec(
            num_scalar_prefetch=0,
            grid=(nb, nk),
            in_specs=[
                pl.BlockSpec((tb, tk), lambda i, k: (i, k)),  # streamed x tiles
                w_spec,                                       # weight (resident if nk==1)
                b_spec,                                       # resident bias
            ],
            # Unpadded (B, N) output: logits make exactly one HBM pass, no wrapper slice.
            out_specs=pl.BlockSpec((tb, N), lambda i, k: (i, 0)),
            scratch_shapes=[pltpu.VMEM((tb, Np), jnp.float32)],
        ),
        compiler_params=pltpu.CompilerParams(
            dimension_semantics=("parallel", "arbitrary"),
            vmem_limit_bytes=vmem_limit,
        ),
        cost_estimate=cost,
    )(x, w_t_padded, bias_padded)


if __name__ == "__main__":
    # Small shapes consistent with the module: batch=8, input_size=32, num_classes=16.
    batch, input_size, num_classes = 8, 32, 16

    key = jax.random.PRNGKey(0)
    kx, kw, kb = jax.random.split(key, 3)

    x = jax.random.normal(kx, (batch, input_size), dtype=jnp.float32)
    # Deterministic param init mimicking torch.nn.Linear's uniform(-1/sqrt(K), 1/sqrt(K)).
    bound = 1.0 / (input_size ** 0.5)
    weight = jax.random.uniform(kw, (num_classes, input_size),
                                minval=-bound, maxval=bound, dtype=jnp.float32)
    bias = jax.random.uniform(kb, (num_classes,),
                              minval=-bound, maxval=bound, dtype=jnp.float32)

    # One-time param layout prep (transpose + lane padding), then forward.
    w_t_padded, bias_padded, n_out = prepare_params(weight, bias)
    y = logistic_regression_forward(x, w_t_padded, bias_padded, n_out)
    y = jax.block_until_ready(y)

    # Correctness check against plain JAX reference.
    y_ref = x @ weight.T + bias
    assert y.shape == (batch, num_classes)
    assert jnp.allclose(y, y_ref, atol=1e-5, rtol=1e-5)

    print("KERNEL_OK")
</pallas_src>

<mosaic_0001>
module attributes {stable_mosaic.version = 11 : i64} {
  func.func @_linear_kernel(%arg0: i32, %arg1: i32, %arg2: memref<8x32xf32, #tpu.memory_space<vmem>>, %arg3: memref<32x128xf32, #tpu.memory_space<vmem>>, %arg4: memref<1x128xf32, #tpu.memory_space<vmem>>, %arg5: memref<8x16xf32, #tpu.memory_space<vmem>>, %arg6: memref<8x128xf32, #tpu.memory_space<vmem>>) attributes {dimension_semantics = [#tpu.dimension_semantics<parallel>, #tpu.dimension_semantics<arbitrary>], iteration_bounds = array<i64: 1, 1>, scalar_prefetch = 0 : i64, scratch_operands = 1 : i64, tpu.core_type = #tpu.core_type<tc>, window_params = [{transform_indices = @transform_0, window_bounds = array<i64: 8, 32>}, {pipeline_mode = #tpu.pipeline_mode<synchronous>, transform_indices = @transform_1, window_bounds = array<i64: 32, 128>}, {pipeline_mode = #tpu.pipeline_mode<synchronous>, transform_indices = @transform_2, window_bounds = array<i64: 1, 128>}, {transform_indices = @transform_3, window_bounds = array<i64: 8, 16>}]} {
    %c0_i32 = arith.constant 0 : i32
    %0 = arith.cmpi eq, %arg1, %c0_i32 : i32
    %1 = arith.extui %0 : i1 to i32
    %c0_i32_0 = arith.constant 0 : i32
    %2 = arith.cmpi ne, %1, %c0_i32_0 : i32
    scf.if %2 {
      %cst_10 = arith.constant 0.000000e+00 : f32
      %12 = vector.broadcast %cst_10 : f32 to vector<8x128xf32>
      %c0_11 = arith.constant 0 : index
      %c0_12 = arith.constant 0 : index
      %13 = vector.load %arg6[%c0_11, %c0_12] : memref<8x128xf32, #tpu.memory_space<vmem>>, vector<8x128xf32>
      tpu.vector_store %arg6[%c0_11, %c0_12], %12 {strides = array<i32>} : memref<8x128xf32, #tpu.memory_space<vmem>>, vector<8x128xf32>,
    } else {
    }
    %c0 = arith.constant 0 : index
    %c0_1 = arith.constant 0 : index
    %3 = vector.load %arg6[%c0, %c0_1] : memref<8x128xf32, #tpu.memory_space<vmem>>, vector<8x128xf32>
    %c0_2 = arith.constant 0 : index
    %c0_3 = arith.constant 0 : index
    %4 = vector.load %arg2[%c0_2, %c0_3] : memref<8x32xf32, #tpu.memory_space<vmem>>, vector<8x32xf32>
    %c0_4 = arith.constant 0 : index
    %c0_5 = arith.constant 0 : index
    %5 = vector.load %arg3[%c0_4, %c0_5] : memref<32x128xf32, #tpu.memory_space<vmem>>, vector<32x128xf32>
    %cst = arith.constant dense<0.000000e+00> : vector<8x128xf32>
    %6 = tpu.matmul %4, %5, %cst {dimension_numbers = #tpu.dot_dimension_numbers<[1], [0], [0], [1], [0, 0, 1, 1], [], []>} : vector<8x32xf32>, vector<32x128xf32>, vector<8x128xf32> -> vector<8x128xf32>
    %7 = arith.addf %3, %6 : vector<8x128xf32>
    %c0_6 = arith.constant 0 : index
    %c0_7 = arith.constant 0 : index
    %8 = vector.load %arg6[%c0_6, %c0_7] : memref<8x128xf32, #tpu.memory_space<vmem>>, vector<8x128xf32>
    tpu.vector_store %arg6[%c0_6, %c0_7], %7 {strides = array<i32>} : memref<8x128xf32, #tpu.memory_space<vmem>>, vector<8x128xf32>,
    %c0_i32_8 = arith.constant 0 : i32
    %9 = arith.cmpi eq, %arg1, %c0_i32_8 : i32
    %10 = arith.extui %9 : i1 to i32
    %c0_i32_9 = arith.constant 0 : i32
    %11 = arith.cmpi ne, %10, %c0_i32_9 : i32
    scf.if %11 {
      %c0_10 = arith.constant 0 : index
      %c0_11 = arith.constant 0 : index
      %12 = vector.load %arg6[%c0_10, %c0_11] : memref<8x128xf32, #tpu.memory_space<vmem>>, vector<8x128xf32>
      %13 = vector.extract_strided_slice %12 {offsets = [0, 0], sizes = [8, 16], strides = [1, 1]} : vector<8x128xf32> to vector<8x16xf32>
      %c0_12 = arith.constant 0 : index
      %c0_13 = arith.constant 0 : index
      %14 = vector.load %arg4[%c0_12, %c0_13] : memref<1x128xf32, #tpu.memory_space<vmem>>, vector<1x128xf32>
      %15 = vector.extract_strided_slice %14 {offsets = [0, 0], sizes = [1, 16], strides = [1, 1]} : vector<1x128xf32> to vector<1x16xf32>
      %16 = vector.broadcast %15 : vector<1x16xf32> to vector<8x16xf32>
      %17 = arith.addf %13, %16 : vector<8x16xf32>
      %c0_14 = arith.constant 0 : index
      %c0_15 = arith.constant 0 : index
      %18 = vector.load %arg5[%c0_14, %c0_15] : memref<8x16xf32, #tpu.memory_space<vmem>>, vector<8x16xf32>
      tpu.vector_store %arg5[%c0_14, %c0_15], %17 {strides = array<i32>} : memref<8x16xf32, #tpu.memory_space<vmem>>, vector<8x16xf32>,
    } else {
    }
    return
  }
  func.func @transform_0(%arg0: i32, %arg1: i32) -> (i32, i32) {
    %c0_i32 = arith.constant 0 : i32
    return %arg0, %arg1 : i32, i32
  }
  func.func @transform_1(%arg0: i32, %arg1: i32) -> (i32, i32) {
    %c0_i32 = arith.constant 0 : i32
    %c0_i32_0 = arith.constant 0 : i32
    return %arg1, %c0_i32 : i32, i32
  }
  func.func @transform_2(%arg0: i32, %arg1: i32) -> (i32, i32) {
    %c0_i32 = arith.constant 0 : i32
    %c0_i32_0 = arith.constant 0 : i32
    %c0_i32_1 = arith.constant 0 : i32
    return %c0_i32, %c0_i32_0 : i32, i32
  }
  func.func @transform_3(%arg0: i32, %arg1: i32) -> (i32, i32) {
    %c0_i32 = arith.constant 0 : i32
    %c0_i32_0 = arith.constant 0 : i32
    return %arg0, %c0_i32 : i32, i32
  }
}

</mosaic_0001>

<llo_original>
// kernel: tpu_custom_call.1
$region0: #{tpu_custom_call.1}
  #allocation0 [shape = 'u32[]', space=smem, size = 0x4, offset = 0x4, fixed_abs, tag = 'smem constant byte address 0x4 - core index']
  #allocation1 [shape = 'u32[144,128]{1,0:T(1,128)}', space=vmem, size = 0x12000, scoped, tag = 'internal scratch']
  #allocation2 [shape = 'f32[8,128]{1,0:T(8,128)}', space=vmem, size = 0x1000, scoped, tag = 'scratch operand']
  %s0 = inlined_call_operand.hbm [shape: f32[8,32], index: 0, kind: input, shape index: {}]
  %s1 = inlined_call_operand.hbm [shape: f32[32,128], index: 1, kind: input, shape index: {}]
  %s2 = inlined_call_operand.vmem [shape: f32[1,128], index: 2, kind: input, shape index: {}]
  %s3 = inlined_call_operand.hbm [shape: f32[8,16], index: 3, kind: output, shape index: {}]
  %s4 = sld [smem:[#allocation0]]
  $region38: #{tpu_custom_call.1} parent=0
    _
  %s6 = ssub.s32 1, %s4
  %s7 = scalar_select 0, %s6, %s4
  $region1: #{tpu_custom_call.1} parent=0
    #allocation3 [shape = 'u8[4096]{0}', space=vmem, size = 0x1000, scoped, tag = 'input window, operand 0, single buffered']
    #allocation4 [shape = 's32[1]{0}', space=sflag, size = 0x4, scoped, tag = 'scoped memory for tpu_custom_call.1']
    #allocation5 [shape = 's32[1]{0}', space=sflag, size = 0x4, scoped, tag = 'scoped memory for tpu_custom_call.1']
    #allocation6 [shape = 'u8[16384]{0}', space=vmem, size = 0x4000, scoped, tag = 'input window, operand 1, single buffered']
    #allocation7 [shape = 's32[1]{0}', space=sflag, size = 0x4, scoped, tag = 'scoped memory for tpu_custom_call.1']
    #allocation8 [shape = 'u8[4096]{0}', space=vmem, size = 0x1000, scoped, tag = 'output window, operand 0, single buffered']
    %8 = vsyncpa [#allocation4], 0
    %9 = vsyncpa [#allocation7], 0
    %10 = vsyncpa [#allocation5], 0
    // Predicated region
    $region2: #{tpu_custom_call.1} parent=1 // pred_check
      _
    $region3: #{tpu_custom_call.1} parent=1 // pred_check_branch
      %12 = sbr.rel (0) target = $region5
    $region4: #{tpu_custom_call.1} parent=1 // pred_region
      %s14 = ssub.s32 128, 128
      %15 = vsyncadd [#allocation4], %s14
      %s17 = sshll.u32 [#allocation3], 4
      %s18 = int_to_ptr.vmem [resolvable:$true] %s17
      %20 = dma.hbm_to_vmem [thread:$0]  %s0, 128, %s18, [#allocation4]
    $region5: #{tpu_custom_call.1} parent=1 // pred_fallthru
      _
    // Predicated region
    $region6: #{tpu_custom_call.1} parent=1 // pred_check
      _
    $region7: #{tpu_custom_call.1} parent=1 // pred_check_branch
      %22 = sbr.rel (0) target = $region9
    $region8: #{tpu_custom_call.1} parent=1 // pred_region
      %s24 = ssub.s32 512, 512
      %25 = vsyncadd [#allocation7], %s24
      %s26 = sshll.u32 [#allocation6], 4
      %s27 = int_to_ptr.vmem [resolvable:$true] %s26
      %32 = dma.hbm_to_vmem [thread:$0]  %s1, 512, %s27, [#allocation7], 128, 128, 8
    $region9: #{tpu_custom_call.1} parent=1 // pred_fallthru
      _
    // Predicated region
    $region10: #{tpu_custom_call.1} parent=1 // pred_check
      _
    $region11: #{tpu_custom_call.1} parent=1 // pred_check_branch
      %34 = sbr.rel (0) target = $region13
    $region12: #{tpu_custom_call.1} parent=1 // pred_region
      _
    $region13: #{tpu_custom_call.1} parent=1 // pred_fallthru
      _
    // Predicated region
    $region14: #{tpu_custom_call.1} parent=1 // pred_check
      _
    $region15: #{tpu_custom_call.1} parent=1 // pred_check_branch
      %36 = sbr.rel (0) target = $region17
    $region16: #{tpu_custom_call.1} parent=1 // pred_region
      %37 = dma.done [#allocation4], 128
    $region17: #{tpu_custom_call.1} parent=1 // pred_fallthru
      _
    // Predicated region
    $region18: #{tpu_custom_call.1} parent=1 // pred_check
      _
    $region19: #{tpu_custom_call.1} parent=1 // pred_check_branch
      %39 = sbr.rel (0) target = $region21
    $region20: #{tpu_custom_call.1} parent=1 // pred_region
      %40 = dma.done [#allocation7], 512
    $region21: #{tpu_custom_call.1} parent=1 // pred_fallthru
      _
    %p41 = scmp.eq.s32.totalorder 0, 0
    // Predicated region
    $region22: #{tpu_custom_call.1} parent=1 // pred_check
      %p42 = pneg %p41
    $region23: #{tpu_custom_call.1} parent=1 // pred_check_branch
      %44 = sbr.rel (%p42) target = $region25
    $region24: #{tpu_custom_call.1} parent=1 // pred_region
      %45 = vst [vmem:[#allocation2] sm:$0xff] 0.0
    $region25: #{tpu_custom_call.1} parent=1 // pred_fallthru
      _
    %v46 = vld [vmem:[#allocation2] sm:$0xff]
    %v47 = vld [vmem:[#allocation3] sm:$0xff]
    %v48 = vld [vmem:[#allocation6] sm:$0xff]
    %v49 = vld [vmem:[#allocation6 + $0x8] sm:$0xff]
    %v50 = vld [vmem:[#allocation6 + $0x10] sm:$0xff]
    %v51 = vld [vmem:[#allocation6 + $0x18] sm:$0xff]
    %vm52 = vcmask 261120
    %v54 = vsel %vm52, %v47, 0
    %56 = vmatprep.subr.mxu0 0.0
    %57 = vmatpush1.msra.mxu0 0.0
    %58 = vmatprep.subr.mxu0 0.0
    %59 = vmatpush1.msra.mxu0 0.0
    %60 = vmatprep.subr.mxu0 0.0
    %61 = vmatpush1.msra.mxu0 0.0
    %62 = vmatprep.subr.mxu0 0.0
    %63 = vmatpush1.msra.mxu0 0.0
    %64 = vmatprep.subr.mxu0 0.0
    %65 = vmatpush1.msra.mxu0 0.0
    %66 = vmatprep.subr.mxu0 0.0
    %67 = vmatpush1.msra.mxu0 0.0
    %68 = vmatprep.subr.mxu0 0.0
    %69 = vmatpush1.msra.mxu0 0.0
    %70 = vmatprep.subr.mxu0 0.0
    %71 = vmatpush1.msra.mxu0 0.0
    %72 = vmatprep.subr.mxu0 0.0
    %73 = vmatpush1.msra.mxu0 0.0
    %74 = vmatprep.subr.mxu0 0.0
    %75 = vmatpush1.msra.mxu0 0.0
    %76 = vmatprep.subr.mxu0 0.0
    %77 = vmatpush1.msra.mxu0 0.0
    %78 = vmatprep.subr.mxu0 0.0
    %79 = vmatpush1.msra.mxu0 0.0
    %80 = vmatprep.subr.mxu0 0.0
    %81 = vmatpush1.msra.mxu0 %v51
    %82 = vmatprep.subr.mxu0 0.0
    %83 = vmatpush1.msra.mxu0 %v50
    %84 = vmatprep.subr.mxu0 0.0
    %85 = vmatpush1.msra.mxu0 %v49
    %86 = vmatprep.subr.mxu0 0.0
    %87 = vmatpush1.msra.mxu0 %v48
    %88 = vmatprep.subr.mxu0 0.0
    %89 = vmatpush2.msra.mxu0 0.0
    %90 = vmatprep.subr.mxu0 0.0
    %91 = vmatpush2.msra.mxu0 0.0
    %92 = vmatprep.subr.mxu0 0.0
    %93 = vmatpush2.msra.mxu0 0.0
    %94 = vmatprep.subr.mxu0 0.0
    %95 = vmatpush2.msra.mxu0 0.0
    %96 = vmatprep.subr.mxu0 0.0
    %97 = vmatpush2.msra.mxu0 0.0
    %98 = vmatprep.subr.mxu0 0.0
    %99 = vmatpush2.msra.mxu0 0.0
    %100 = vmatprep.subr.mxu0 0.0
    %101 = vmatpush2.msra.mxu0 0.0
    %102 = vmatprep.subr.mxu0 0.0
    %103 = vmatpush2.msra.mxu0 0.0
    %104 = vmatprep.subr.mxu0 0.0
    %105 = vmatpush2.msra.mxu0 0.0
    %106 = vmatprep.subr.mxu0 0.0
    %107 = vmatpush2.msra.mxu0 0.0
    %108 = vmatprep.subr.mxu0 0.0
    %109 = vmatpush2.msra.mxu0 0.0
    %110 = vmatprep.subr.mxu0 0.0
    %111 = vmatpush2.msra.mxu0 0.0
    %112 = vmatprep.subr.mxu0 0.0
    %113 = vmatpush2.msra.mxu0 0.0
    %114 = vmatprep.subr.mxu0 0.0
    %115 = vmatpush2.msra.mxu0 0.0
    %116 = vmatprep.subr.mxu0 0.0
    %117 = vmatpush2.msra.mxu0 0.0
    %118 = vmatprep.subr.mxu0 0.0
    %119 = vmatpush2.msra.mxu0 0.0
    %120 = vmatprep.mubr.f32.mxu0 0.0
    %121 = vmatmul.mubr.f32.gmra.mxu0 %v54
    %v122 = vpop.f32.mrf.mxu0
    %v123 = vadd.f32 0.0, %v122
    %v124 = vpop.f32.mrf.mxu0
    %125 = vdwg.mxu0
    %v126 = vadd.f32 %v46, %v123
    %127 = vst [vmem:[#allocation2] sm:$0xff] %v126
    // Predicated region
    $region26: #{tpu_custom_call.1} parent=1 // pred_check
      %p128 = pneg %p41
    $region27: #{tpu_custom_call.1} parent=1 // pred_check_branch
      %130 = sbr.rel (%p128) target = $region29
    $region28: #{tpu_custom_call.1} parent=1 // pred_region
      %v131 = vld [vmem:[#allocation2] sm:$0xff]
      %v132 = vld [vmem:[%s2] sm:$0x1]
      %v134 = vlaneseq
      %v135 = vshrl.u32 %v134, 7
      %v136 = vsub.s32 0, %v135
      %v137 = vrot.slane %v132, %v136
      %v139 = vadd.f32 %v131, %v137
      %vm140 = vcmask 130048
      %141 = vst.msk [vmem:[#allocation8] sm:$0xff] %vm140, %v139
    $region29: #{tpu_custom_call.1} parent=1 // pred_fallthru
      _
    // Predicated region
    $region30: #{tpu_custom_call.1} parent=1 // pred_check
      _
    $region31: #{tpu_custom_call.1} parent=1 // pred_check_branch
      %143 = sbr.rel (0) target = $region33
    $region32: #{tpu_custom_call.1} parent=1 // pred_region
      %s145 = ssub.s32 128, 128
      %146 = vsyncadd [#allocation5], %s145
      %s148 = sshll.u32 [#allocation8], 4
      %s149 = int_to_ptr.vmem [resolvable:$true] %s148
      %151 = dma.vmem_to_hbm [thread:$0]  %s149, 128, %s3, [#allocation5]
    $region33: #{tpu_custom_call.1} parent=1 // pred_fallthru
      _
    // Predicated region
    $region34: #{tpu_custom_call.1} parent=1 // pred_check
      _
    $region35: #{tpu_custom_call.1} parent=1 // pred_check_branch
      %153 = sbr.rel (0) target = $region37
    $region36: #{tpu_custom_call.1} parent=1 // pred_region
      %154 = dma.done [#allocation5], 128
    $region37: #{tpu_custom_call.1} parent=1 // pred_fallthru
      _
    %155 = vsyncpa [#allocation4], 1
    %156 = vsyncpa [#allocation7], 1
    %157 = vsyncpa [#allocation5], 1

</llo_original>
